<compile_context>
chip_gen: v5e
topology: v5e:2x2
jax: 0.10.0
libtpu: 0.0.40
codegen_flags: <defaults>
</compile_context>

<pallas_src>
import math

import jax
import jax.numpy as jnp
from jax.experimental import pallas as pl
from jax.experimental.pallas import tpu as pltpu

_SUBLANE = 8
_DEFAULT_TM = 512            # rows per batch tile; shrunk automatically if VMEM-tight
_VMEM_BUDGET = 48 << 20      # conservative per-TC budget (v7x has 64 MiB per TC)


def _mlp_kernel(x_ref, w1_ref, b1_ref, w2_ref, b2_ref, o_ref):
    # Fused: matmul1 + bias + ReLU -> matmul2 + bias, all in VMEM, f32 accumulation.
    h = jnp.dot(x_ref[...], w1_ref[...], preferred_element_type=jnp.float32)
    h = jnp.maximum(h + b1_ref[...], 0.0)
    out = jnp.dot(h.astype(w2_ref.dtype), w2_ref[...],
                  preferred_element_type=jnp.float32)
    o_ref[...] = (out + b2_ref[...]).astype(o_ref.dtype)


def edge_feat_process(x, w1, b1, w2, b2, *, tm=_DEFAULT_TM):
    """x: [B, dim1]; w1: [dim1, dim3]; b1: [1, dim3]; w2: [dim3, dim4]; b2: [1, dim4]."""
    B, d_in = x.shape
    d3 = w1.shape[1]
    d4 = w2.shape[1]

    itemsize = jnp.dtype(x.dtype).itemsize

    # --- batch tile selection + VMEM budgeting (no padding anywhere) -------
    if B <= tm:
        tm = B                                   # single block == full dim (always legal)
    else:
        tm = max(_SUBLANE, (tm // _SUBLANE) * _SUBLANE)  # multiple of 8 when tiling

    # Weights are VMEM-resident (count 2x to be safe about buffering); x/out
    # tiles are double-buffered; the f32 intermediate h needs tm*d3 f32.
    weight_bytes = (d_in * d3 + d3 * d4 + d3 + d4) * itemsize

    def _tile_bytes(t):
        return 2 * t * (d_in + d4) * itemsize + t * d3 * 4

    while tm > _SUBLANE and 2 * weight_bytes + _tile_bytes(tm) > _VMEM_BUDGET:
        tm = max(_SUBLANE, tm // 2)

    grid = (pl.cdiv(B, tm),)

    needed = 2 * weight_bytes + _tile_bytes(tm) + (4 << 20)       # + headroom
    vmem_limit = int(min(max(needed, 32 << 20), 64 << 20))

    cost = pl.CostEstimate(
        flops=2 * B * (d_in * d3 + d3 * d4),
        transcendentals=0,
        bytes_accessed=itemsize * (B * d_in + d_in * d3 + d3
                                   + d3 * d4 + d4 + B * d4),
    )

    return pl.pallas_call(
        _mlp_kernel,
        out_shape=jax.ShapeDtypeStruct((B, d4), x.dtype),
        grid=grid,
        in_specs=[
            pl.BlockSpec((tm, d_in), lambda i: (i, 0)),   # x tile: streamed/pipelined
            pl.BlockSpec((d_in, d3), lambda i: (0, 0)),   # weights stay VMEM-resident
            pl.BlockSpec((1, d3), lambda i: (0, 0)),
            pl.BlockSpec((d3, d4), lambda i: (0, 0)),
            pl.BlockSpec((1, d4), lambda i: (0, 0)),
        ],
        out_specs=pl.BlockSpec((tm, d4), lambda i: (i, 0)),
        compiler_params=pltpu.CompilerParams(
            dimension_semantics=("parallel",),
            vmem_limit_bytes=vmem_limit,
        ),
        cost_estimate=cost,
    )(x, w1, b1, w2, b2)


def init_params(key, dim1, dim3, dim4, dtype=jnp.float32):
    """Matches the PyTorch module's init.

    Weights: Xavier-normal (as in the module). Biases: torch.nn.Linear default
    uniform(-1/sqrt(fan_in), 1/sqrt(fan_in)). Weights are returned already
    transposed to (in_features, out_features).
    """
    k1, k2, k3, k4 = jax.random.split(key, 4)

    std1 = math.sqrt(2.0 / (dim1 + dim3))
    std2 = math.sqrt(2.0 / (dim3 + dim4))
    w1 = (jax.random.normal(k1, (dim1, dim3), dtype=jnp.float32) * std1).astype(dtype)
    w2 = (jax.random.normal(k2, (dim3, dim4), dtype=jnp.float32) * std2).astype(dtype)

    bound1 = 1.0 / math.sqrt(dim1)
    bound2 = 1.0 / math.sqrt(dim3)
    b1 = jax.random.uniform(k3, (1, dim3), minval=-bound1, maxval=bound1,
                            dtype=jnp.float32).astype(dtype)
    b2 = jax.random.uniform(k4, (1, dim4), minval=-bound2, maxval=bound2,
                            dtype=jnp.float32).astype(dtype)
    return w1, b1, w2, b2


def _reference(x, w1, b1, w2, b2):
    h = jnp.maximum(x @ w1 + b1, 0.0)
    return h @ w2 + b2          # note: no ReLU after fc2 (matches the module)


if __name__ == "__main__":
    key = jax.random.PRNGKey(0)
    kx, kp = jax.random.split(key)

    batch, dim1, dim3, dim4 = 16, 12, 32, 16
    x = jax.random.normal(kx, (batch, dim1), dtype=jnp.float32)
    w1, b1, w2, b2 = init_params(kp, dim1, dim3, dim4)

    out = edge_feat_process(x, w1, b1, w2, b2)
    out = jax.block_until_ready(out)

    ref = _reference(x, w1, b1, w2, b2)
    assert out.shape == (batch, dim4)
    assert jnp.allclose(out, ref, atol=1e-5, rtol=1e-5)

    # Also exercise a batch that does not divide the tile size (masked
    # trailing block path), at a size large enough to use multiple grid steps.
    B2 = 1037
    x2 = jax.random.normal(kx, (B2, dim1), dtype=jnp.float32)
    out2 = jax.block_until_ready(edge_feat_process(x2, w1, b1, w2, b2))
    assert out2.shape == (B2, dim4)
    assert jnp.allclose(out2, _reference(x2, w1, b1, w2, b2), atol=1e-5, rtol=1e-5)

    print("KERNEL_OK")
</pallas_src>

<mosaic_0001>
module attributes {stable_mosaic.version = 11 : i64} {
  func.func @_mlp_kernel(%arg0: i32, %arg1: memref<16x12xf32, #tpu.memory_space<vmem>>, %arg2: memref<12x32xf32, #tpu.memory_space<vmem>>, %arg3: memref<1x32xf32, #tpu.memory_space<vmem>>, %arg4: memref<32x16xf32, #tpu.memory_space<vmem>>, %arg5: memref<1x16xf32, #tpu.memory_space<vmem>>, %arg6: memref<16x16xf32, #tpu.memory_space<vmem>>) attributes {dimension_semantics = [#tpu.dimension_semantics<parallel>], iteration_bounds = array<i64: 1>, scalar_prefetch = 0 : i64, scratch_operands = 0 : i64, tpu.core_type = #tpu.core_type<tc>, window_params = [{transform_indices = @transform_0, window_bounds = array<i64: 16, 12>}, {pipeline_mode = #tpu.pipeline_mode<synchronous>, transform_indices = @transform_1, window_bounds = array<i64: 12, 32>}, {pipeline_mode = #tpu.pipeline_mode<synchronous>, transform_indices = @transform_2, window_bounds = array<i64: 1, 32>}, {pipeline_mode = #tpu.pipeline_mode<synchronous>, transform_indices = @transform_3, window_bounds = array<i64: 32, 16>}, {pipeline_mode = #tpu.pipeline_mode<synchronous>, transform_indices = @transform_4, window_bounds = array<i64: 1, 16>}, {transform_indices = @transform_5, window_bounds = array<i64: 16, 16>}]} {
    %c0 = arith.constant 0 : index
    %c0_0 = arith.constant 0 : index
    %0 = vector.load %arg1[%c0, %c0_0] : memref<16x12xf32, #tpu.memory_space<vmem>>, vector<16x12xf32>
    %c0_1 = arith.constant 0 : index
    %c0_2 = arith.constant 0 : index
    %1 = vector.load %arg2[%c0_1, %c0_2] : memref<12x32xf32, #tpu.memory_space<vmem>>, vector<12x32xf32>
    %cst = arith.constant dense<0.000000e+00> : vector<16x32xf32>
    %2 = tpu.matmul %0, %1, %cst {dimension_numbers = #tpu.dot_dimension_numbers<[1], [0], [0], [1], [0, 0, 1, 1], [], []>} : vector<16x12xf32>, vector<12x32xf32>, vector<16x32xf32> -> vector<16x32xf32>
    %c0_3 = arith.constant 0 : index
    %c0_4 = arith.constant 0 : index
    %3 = vector.load %arg3[%c0_3, %c0_4] : memref<1x32xf32, #tpu.memory_space<vmem>>, vector<1x32xf32>
    %4 = vector.broadcast %3 : vector<1x32xf32> to vector<16x32xf32>
    %5 = arith.addf %2, %4 : vector<16x32xf32>
    %cst_5 = arith.constant 0.000000e+00 : f32
    %6 = vector.broadcast %cst_5 : f32 to vector<16x32xf32>
    %7 = arith.maximumf %5, %6 : vector<16x32xf32>
    %c0_6 = arith.constant 0 : index
    %c0_7 = arith.constant 0 : index
    %8 = vector.load %arg4[%c0_6, %c0_7] : memref<32x16xf32, #tpu.memory_space<vmem>>, vector<32x16xf32>
    %cst_8 = arith.constant dense<0.000000e+00> : vector<16x16xf32>
    %9 = tpu.matmul %7, %8, %cst_8 {dimension_numbers = #tpu.dot_dimension_numbers<[1], [0], [0], [1], [0, 0, 1, 1], [], []>} : vector<16x32xf32>, vector<32x16xf32>, vector<16x16xf32> -> vector<16x16xf32>
    %c0_9 = arith.constant 0 : index
    %c0_10 = arith.constant 0 : index
    %10 = vector.load %arg5[%c0_9, %c0_10] : memref<1x16xf32, #tpu.memory_space<vmem>>, vector<1x16xf32>
    %11 = vector.broadcast %10 : vector<1x16xf32> to vector<16x16xf32>
    %12 = arith.addf %9, %11 : vector<16x16xf32>
    %c0_11 = arith.constant 0 : index
    %c0_12 = arith.constant 0 : index
    %13 = vector.load %arg6[%c0_11, %c0_12] : memref<16x16xf32, #tpu.memory_space<vmem>>, vector<16x16xf32>
    tpu.vector_store %arg6[%c0_11, %c0_12], %12 {strides = array<i32>} : memref<16x16xf32, #tpu.memory_space<vmem>>, vector<16x16xf32>,
    return
  }
  func.func @transform_0(%arg0: i32) -> (i32, i32) {
    %c0_i32 = arith.constant 0 : i32
    %c0_i32_0 = arith.constant 0 : i32
    return %arg0, %c0_i32 : i32, i32
  }
  func.func @transform_1(%arg0: i32) -> (i32, i32) {
    %c0_i32 = arith.constant 0 : i32
    %c0_i32_0 = arith.constant 0 : i32
    %c0_i32_1 = arith.constant 0 : i32
    return %c0_i32, %c0_i32_0 : i32, i32
  }
  func.func @transform_2(%arg0: i32) -> (i32, i32) {
    %c0_i32 = arith.constant 0 : i32
    %c0_i32_0 = arith.constant 0 : i32
    %c0_i32_1 = arith.constant 0 : i32
    return %c0_i32, %c0_i32_0 : i32, i32
  }
  func.func @transform_3(%arg0: i32) -> (i32, i32) {
    %c0_i32 = arith.constant 0 : i32
    %c0_i32_0 = arith.constant 0 : i32
    %c0_i32_1 = arith.constant 0 : i32
    return %c0_i32, %c0_i32_0 : i32, i32
  }
  func.func @transform_4(%arg0: i32) -> (i32, i32) {
    %c0_i32 = arith.constant 0 : i32
    %c0_i32_0 = arith.constant 0 : i32
    %c0_i32_1 = arith.constant 0 : i32
    return %c0_i32, %c0_i32_0 : i32, i32
  }
  func.func @transform_5(%arg0: i32) -> (i32, i32) {
    %c0_i32 = arith.constant 0 : i32
    %c0_i32_0 = arith.constant 0 : i32
    return %arg0, %c0_i32 : i32, i32
  }
}

</mosaic_0001>

<llo_original>
// kernel: tpu_custom_call.1
$region0: #{tpu_custom_call.1}
  #allocation0 [shape = 'u32[]', space=smem, size = 0x4, offset = 0x4, fixed_abs, tag = 'smem constant byte address 0x4 - core index']
  #allocation1 [shape = 'u32[72,128]{1,0:T(1,128)}', space=vmem, size = 0x9000, scoped, tag = 'internal scratch']
  %s0 = inlined_call_operand.vmem [shape: f32[16,12], index: 0, kind: input, shape index: {}]
  %s1 = inlined_call_operand.vmem [shape: f32[12,32], index: 1, kind: input, shape index: {}]
  %s2 = inlined_call_operand.vmem [shape: f32[1,32], index: 2, kind: input, shape index: {}]
  %s3 = inlined_call_operand.vmem [shape: f32[32,16], index: 3, kind: input, shape index: {}]
  %s4 = inlined_call_operand.vmem [shape: f32[1,16], index: 4, kind: input, shape index: {}]
  %s5 = inlined_call_operand.hbm [shape: f32[16,16], index: 5, kind: output, shape index: {}]
  %s6 = sld [smem:[#allocation0]]
  $region30: #{tpu_custom_call.1} parent=0
    _
  %s8 = ssub.s32 1, %s6
  %s9 = scalar_select 0, %s8, %s6
  $region1: #{tpu_custom_call.1} parent=0
    #allocation2 [shape = 'u8[8192]{0}', space=vmem, size = 0x2000, scoped, tag = 'output window, operand 0, single buffered']
    #allocation3 [shape = 's32[1]{0}', space=sflag, size = 0x4, scoped, tag = 'scoped memory for tpu_custom_call.1']
    %10 = vsyncpa [#allocation3], 0
    // Predicated region
    $region2: #{tpu_custom_call.1} parent=1 // pred_check
      _
    $region3: #{tpu_custom_call.1} parent=1 // pred_check_branch
      %12 = sbr.rel (0) target = $region5
    $region4: #{tpu_custom_call.1} parent=1 // pred_region
      _
    $region5: #{tpu_custom_call.1} parent=1 // pred_fallthru
      _
    // Predicated region
    $region6: #{tpu_custom_call.1} parent=1 // pred_check
      _
    $region7: #{tpu_custom_call.1} parent=1 // pred_check_branch
      %14 = sbr.rel (0) target = $region9
    $region8: #{tpu_custom_call.1} parent=1 // pred_region
      _
    $region9: #{tpu_custom_call.1} parent=1 // pred_fallthru
      _
    // Predicated region
    $region10: #{tpu_custom_call.1} parent=1 // pred_check
      _
    $region11: #{tpu_custom_call.1} parent=1 // pred_check_branch
      %16 = sbr.rel (0) target = $region13
    $region12: #{tpu_custom_call.1} parent=1 // pred_region
      _
    $region13: #{tpu_custom_call.1} parent=1 // pred_fallthru
      _
    // Predicated region
    $region14: #{tpu_custom_call.1} parent=1 // pred_check
      _
    $region15: #{tpu_custom_call.1} parent=1 // pred_check_branch
      %18 = sbr.rel (0) target = $region17
    $region16: #{tpu_custom_call.1} parent=1 // pred_region
      _
    $region17: #{tpu_custom_call.1} parent=1 // pred_fallthru
      _
    // Predicated region
    $region18: #{tpu_custom_call.1} parent=1 // pred_check
      _
    $region19: #{tpu_custom_call.1} parent=1 // pred_check_branch
      %20 = sbr.rel (0) target = $region21
    $region20: #{tpu_custom_call.1} parent=1 // pred_region
      _
    $region21: #{tpu_custom_call.1} parent=1 // pred_fallthru
      _
    %v21 = vld [vmem:[%s0] sm:$0xff]
    %v22 = vld [vmem:[%s0 + $0x8] sm:$0xff]
    %v23 = vld [vmem:[%s1] sm:$0xff]
    %v24 = vld [vmem:[%s1 + $0x8] sm:$0xf]
    %v25 = vld [vmem:[%s2] sm:$0x1]
    %v27 = vperm.slane %v25, 0
    %vm29 = vcmask 97280
    %v31 = vsel %vm29, %v21, 0
    %v34 = vsel %vm29, %v22, 0
    %vm36 = vcmask 1043456
    %v38 = vsel %vm36, %v24, 0
    %40 = vmatpush.msra.mxu0 0.0
    %41 = vmatpush.msra.mxu0 0.0
    %42 = vmatpush.msra.mxu0 0.0
    %43 = vmatpush.msra.mxu0 0.0
    %44 = vmatpush.msra.mxu0 0.0
    %45 = vmatpush.msra.mxu0 0.0
    %46 = vmatpush.msra.mxu0 0.0
    %47 = vmatpush.msra.mxu0 0.0
    %48 = vmatpush.msra.mxu0 0.0
    %49 = vmatpush.msra.mxu0 0.0
    %50 = vmatpush.msra.mxu0 0.0
    %51 = vmatpush.msra.mxu0 0.0
    %52 = vmatpush.msra.mxu0 0.0
    %53 = vmatpush.msra.mxu0 0.0
    %54 = vmatpush.msra.mxu0 %v38
    %55 = vmatpush.msra.mxu0 %v23
    %56 = vmatmul.f32.gmra.mxu0 %v31
    %v57 = vpop.f32.mrf.mxu0
    %v58 = vadd.f32 %v27, %v57
    %59 = vmatmul.f32.gmra.mxu0 %v34
    %v60 = vpop.f32.mrf.mxu0
    %v61 = vadd.f32 %v27, %v60
    %62 = vdwg.mxu0
    %v63 = vmax.f32 %v58, 0.0
    %v64 = vmax.f32 %v61, 0.0
    %v65 = vld [vmem:[%s3] sm:$0xff]
    %v66 = vld [vmem:[%s3 + $0x8] sm:$0xff]
    %v67 = vld [vmem:[%s3 + $0x10] sm:$0xff]
    %v68 = vld [vmem:[%s3 + $0x18] sm:$0xff]
    %v69 = vld [vmem:[%s4] sm:$0x1]
    %v71 = vperm.slane %v69, 0
    %vm73 = vcmask 261120
    %v75 = vsel %vm73, %v63, 0
    %v78 = vsel %vm73, %v64, 0
    %80 = vmatpush.msra.mxu0 0.0
    %81 = vmatpush.msra.mxu0 0.0
    %82 = vmatpush.msra.mxu0 0.0
    %83 = vmatpush.msra.mxu0 0.0
    %84 = vmatpush.msra.mxu0 0.0
    %85 = vmatpush.msra.mxu0 0.0
    %86 = vmatpush.msra.mxu0 0.0
    %87 = vmatpush.msra.mxu0 0.0
    %88 = vmatpush.msra.mxu0 0.0
    %89 = vmatpush.msra.mxu0 0.0
    %90 = vmatpush.msra.mxu0 0.0
    %91 = vmatpush.msra.mxu0 0.0
    %92 = vmatpush.msra.mxu0 %v68
    %93 = vmatpush.msra.mxu0 %v67
    %94 = vmatpush.msra.mxu0 %v66
    %95 = vmatpush.msra.mxu0 %v65
    %96 = vmatmul.f32.gmra.mxu0 %v75
    %v97 = vpop.f32.mrf.mxu0
    %v98 = vadd.f32 %v71, %v97
    %99 = vmatmul.f32.gmra.mxu0 %v78
    %v100 = vpop.f32.mrf.mxu0
    %v101 = vadd.f32 %v71, %v100
    %102 = vdwg.mxu0
    %vm103 = vcmask 130048
    %104 = vst.msk [vmem:[#allocation2] sm:$0xff] %vm103, %v98
    %105 = vst.msk [vmem:[#allocation2 + $0x8] sm:$0xff] %vm103, %v101
    // Predicated region
    $region22: #{tpu_custom_call.1} parent=1 // pred_check
      _
    $region23: #{tpu_custom_call.1} parent=1 // pred_check_branch
      %107 = sbr.rel (0) target = $region25
    $region24: #{tpu_custom_call.1} parent=1 // pred_region
      %109 = vsyncadd [#allocation3], 0
      %s110 = sshll.u32 [#allocation2], 4
      %s111 = int_to_ptr.vmem [resolvable:$true] %s110
      %s112 = sshll.u32 %s5, 4
      %s113 = int_to_ptr.hbm [resolvable:$true] %s112
      %118 = dma.vmem_to_hbm [thread:$0]  %s111, 256, %s113, [#allocation3], 128, 128, 8
    $region25: #{tpu_custom_call.1} parent=1 // pred_fallthru
      _
    // Predicated region
    $region26: #{tpu_custom_call.1} parent=1 // pred_check
      _
    $region27: #{tpu_custom_call.1} parent=1 // pred_check_branch
      %120 = sbr.rel (0) target = $region29
    $region28: #{tpu_custom_call.1} parent=1 // pred_region
      %122 = dma.done [#allocation3], 256
    $region29: #{tpu_custom_call.1} parent=1 // pred_fallthru
      _
    %123 = vsyncpa [#allocation3], 1

</llo_original>
